<compile_context>
chip_gen: v6e
topology: v6e:2x2x1
jax: 0.10.0
libtpu: 0.0.40
codegen_flags: <defaults>
</compile_context>

<pallas_src>
import numpy as np
import jax
import jax.numpy as jnp
from jax.experimental import pallas as pl
from jax.experimental.pallas import tpu as pltpu


def _make_kernel(Ct, HW, shifts):
    """Ct = Bt*C rows per batch-tile, HW = H*W lanes, shifts = 9 static lane shifts."""
    C2t = 2 * Ct

    def stencil(v, w_ref):
        # v: (rows, HW); w_ref: (9, rows, HW) tap weights with boundary masks
        # pre-fused host-side.  9 VPU MACs; shifts go to the XLU via pltpu.roll.
        acc = v * w_ref[4]                                   # center tap, shift == 0
        for t in range(9):
            if t == 4:
                continue
            acc = acc + pltpu.roll(v, shifts[t], 1) * w_ref[t]
        return acc

    def kernel(x_ref, w0_ref, wg_ref, w2_ref, wd_ref, w3_ref, out_ref):
        x = x_ref[0].astype(jnp.float32)                              # (Ct, HW)

        # conv0[0]: 1x1 expand (C->2C) + ReLU6, with the even/odd partner
        # permutation fused (weight rows duplicated host-side) -> (4Ct, HW)
        # laid out as [y_img0..y_imgBt-1 ; swap(y)_img0..swap(y)_imgBt-1].
        y = jnp.dot(w0_ref[...], x, preferred_element_type=jnp.float32)
        y = jnp.clip(y, 0.0, 6.0)

        # conv0[2]: grouped (group size 2) dilated 3x3 + ReLU6.
        g = stencil(y, wg_ref)                                        # (4Ct, HW)
        g = jnp.clip(g[:C2t] + g[C2t:], 0.0, 6.0)                     # (2Ct, HW)

        # conv0[4]: 1x1 project (2C -> C), no activation.
        z = jnp.dot(w2_ref[...], g, preferred_element_type=jnp.float32)   # (Ct, HW)

        # conv1[0]: depthwise dilated 3x3 + ReLU6.
        a = jnp.clip(stencil(z, wd_ref), 0.0, 6.0)                    # (Ct, HW)

        # conv1[2]: 1x1 (C -> C) + residual (x re-read: short live range).
        r = jnp.dot(w3_ref[...], a, preferred_element_type=jnp.float32)
        out_ref[0] = (r + x_ref[0].astype(jnp.float32)).astype(out_ref.dtype)

    return kernel


def depthwise_dilated_residual_block(x_nchw, params, dilation):
    """x_nchw: (B, C, H, W). params: torch-layout (OIHW) conv weights."""
    w0, wg_t, w2, wd_t, w3 = params
    B, C, H, W = x_nchw.shape
    C2 = 2 * C
    HW = H * W
    d = dilation

    # Batch-tile: pack Bt images along sublanes so (Bt*C, HW) fills 8-sublane vregs.
    Bt = max(1, min(B, 8 // C)) if C < 8 else 1
    while B % Bt:
        Bt -= 1
    Ct = Bt * C
    nsteps = B // Bt

    # ---- host-side (numpy) tap shifts, boundary masks, weight reformatting ----
    pos = np.arange(HW)
    hh, ww = pos // W, pos % W
    shifts, masks = [], []
    for ki in range(3):
        for kj in range(3):
            dh, dw = (ki - 1) * d, (kj - 1) * d
            shifts.append((-(dh * W + dw)) % HW)              # non-negative lane shift
            masks.append(((hh + dh >= 0) & (hh + dh < H) &
                          (ww + dw >= 0) & (ww + dw < W)).astype(np.float32))
    M = np.stack(masks, axis=0)                               # (9, HW)

    eye = np.eye(Bt, dtype=np.float32)

    # 1x1 expand, fused even/odd pair swap, block-diagonal over the batch tile.
    W0 = np.asarray(w0, np.float32)[:, :, 0, 0]               # (2C, C)
    swap = np.arange(C2) ^ 1
    W0BD = np.concatenate([np.kron(eye, W0),
                           np.kron(eye, W0[swap])], axis=0)   # (4Ct, Ct)

    # Grouped 3x3 taps split into "own channel" / "partner channel" rows,
    # tiled over the batch tile, boundary masks fused in -> (9, 4Ct, HW).
    wg_np = np.asarray(wg_t, np.float32).reshape(C2, 2, 9)
    par = np.arange(C2) % 2
    w_same = wg_np[np.arange(C2), par, :]                     # (2C, 9)
    w_part = wg_np[np.arange(C2), 1 - par, :]                 # (2C, 9)
    WG_rows = np.concatenate([np.tile(w_same, (Bt, 1)),
                              np.tile(w_part, (Bt, 1))], axis=0)      # (4Ct, 9)
    WG = WG_rows.T[:, :, None] * M[:, None, :]                # (9, 4Ct, HW)

    # 1x1 project, block-diagonal over the batch tile.
    W2BD = np.kron(eye, np.asarray(w2, np.float32)[:, :, 0, 0])       # (Ct, 2Ct)

    # Depthwise 3x3 taps, tiled over the batch tile, masks fused -> (9, Ct, HW).
    wd_rows = np.asarray(wd_t, np.float32)[:, 0].reshape(C, 9)
    WD_rows = np.tile(wd_rows, (Bt, 1))                       # (Ct, 9)
    WD = WD_rows.T[:, :, None] * M[:, None, :]                # (9, Ct, HW)

    # Final 1x1, block-diagonal over the batch tile.
    W3BD = np.kron(eye, np.asarray(w3, np.float32)[:, :, 0, 0])       # (Ct, Ct)

    # NCHW -> (B/Bt, Bt*C, H*W): contiguous reshape, lane-dense last dim.
    x_tiles = x_nchw.reshape(nsteps, Ct, HW)

    flops_tile = (2 * 4 * Ct * Ct * HW        # 1x1 expand (incl. permuted copy)
                  + 2 * 9 * 4 * Ct * HW       # grouped stencil MACs
                  + 2 * Ct * 2 * Ct * HW      # 1x1 project
                  + 2 * 9 * Ct * HW           # depthwise stencil MACs
                  + 2 * Ct * Ct * HW          # final 1x1
                  + Ct * HW)                  # residual add
    bytes_accessed = 4 * (2 * B * C * HW
                          + W0BD.size + WG.size + W2BD.size + WD.size + W3BD.size)
    cost = pl.CostEstimate(flops=nsteps * flops_tile, transcendentals=0,
                           bytes_accessed=bytes_accessed)

    kernel = _make_kernel(Ct, HW, shifts)
    out_tiles = pl.pallas_call(
        kernel,
        out_shape=jax.ShapeDtypeStruct((nsteps, Ct, HW), x_nchw.dtype),
        grid_spec=pltpu.PrefetchScalarGridSpec(
            num_scalar_prefetch=0,
            grid=(nsteps,),
            in_specs=[
                pl.BlockSpec((1, Ct, HW), lambda i: (i, 0, 0)),
                pl.BlockSpec((4 * Ct, Ct), lambda i: (0, 0)),
                pl.BlockSpec((9, 4 * Ct, HW), lambda i: (0, 0, 0)),
                pl.BlockSpec((Ct, 2 * Ct), lambda i: (0, 0)),
                pl.BlockSpec((9, Ct, HW), lambda i: (0, 0, 0)),
                pl.BlockSpec((Ct, Ct), lambda i: (0, 0)),
            ],
            out_specs=pl.BlockSpec((1, Ct, HW), lambda i: (i, 0, 0)),
        ),
        compiler_params=pltpu.CompilerParams(
            dimension_semantics=("parallel",)),
        cost_estimate=cost,
    )(x_tiles,
      jnp.asarray(W0BD), jnp.asarray(WG), jnp.asarray(W2BD),
      jnp.asarray(WD), jnp.asarray(W3BD))

    return out_tiles.reshape(B, C, H, W)


def ref_forward(x, params, dilation):
    """Pure-JAX reference (NCHW), mirrors the PyTorch module exactly."""
    w0, wg, w2, wd, w3 = params
    d = dilation
    C = x.shape[1]

    def conv(t, w, pad, dil, groups):
        return jax.lax.conv_general_dilated(
            t, w, window_strides=(1, 1), padding=[(pad, pad), (pad, pad)],
            rhs_dilation=(dil, dil), feature_group_count=groups,
            dimension_numbers=('NCHW', 'OIHW', 'NCHW'))

    relu6 = lambda t: jnp.clip(t, 0.0, 6.0)
    y = relu6(conv(x, w0, 0, 1, 1))
    y = relu6(conv(y, wg, d, d, C))
    y = conv(y, w2, 0, 1, 1)
    y = relu6(conv(y, wd, d, d, C))
    y = conv(y, w3, 0, 1, 1)
    return y + x


if __name__ == "__main__":
    B, C, H, W = 2, 4, 16, 16
    dilation = 2
    reduced_channels = C // 2   # present in the module __init__, unused by forward

    key = jax.random.PRNGKey(0)
    k = jax.random.split(key, 6)
    x = jax.random.normal(k[0], (B, C, H, W), jnp.float32)
    # torch-layout weights (deterministic synthetic init)
    w0 = jax.random.normal(k[1], (2 * C, C, 1, 1), jnp.float32) * 0.3
    wg = jax.random.normal(k[2], (2 * C, 2, 3, 3), jnp.float32) * 0.3
    w2 = jax.random.normal(k[3], (C, 2 * C, 1, 1), jnp.float32) * 0.3
    wd = jax.random.normal(k[4], (C, 1, 3, 3), jnp.float32) * 0.3
    w3 = jax.random.normal(k[5], (C, C, 1, 1), jnp.float32) * 0.3
    params = (w0, wg, w2, wd, w3)

    out = depthwise_dilated_residual_block(x, params, dilation)
    out = jax.block_until_ready(out)

    ref = ref_forward(x, params, dilation)
    max_err = float(jnp.max(jnp.abs(out - ref)))
    assert jnp.allclose(out, ref, atol=1e-4, rtol=1e-4), f"max_err={max_err}"
    print("KERNEL_OK")
</pallas_src>

<mosaic_0001>
module attributes {stable_mosaic.version = 11 : i64} {
  func.func @kernel(%arg0: i32, %arg1: memref<1x8x256xf32, #tpu.memory_space<vmem>>, %arg2: memref<32x8xf32, #tpu.memory_space<vmem>>, %arg3: memref<9x32x256xf32, #tpu.memory_space<vmem>>, %arg4: memref<8x16xf32, #tpu.memory_space<vmem>>, %arg5: memref<9x8x256xf32, #tpu.memory_space<vmem>>, %arg6: memref<8x8xf32, #tpu.memory_space<vmem>>, %arg7: memref<1x8x256xf32, #tpu.memory_space<vmem>>) attributes {dimension_semantics = [#tpu.dimension_semantics<parallel>], iteration_bounds = array<i64: 1>, scalar_prefetch = 0 : i64, scratch_operands = 0 : i64, tpu.core_type = #tpu.core_type<tc>, window_params = [{transform_indices = @transform_0, window_bounds = array<i64: 1, 8, 256>}, {pipeline_mode = #tpu.pipeline_mode<synchronous>, transform_indices = @transform_1, window_bounds = array<i64: 32, 8>}, {pipeline_mode = #tpu.pipeline_mode<synchronous>, transform_indices = @transform_2, window_bounds = array<i64: 9, 32, 256>}, {pipeline_mode = #tpu.pipeline_mode<synchronous>, transform_indices = @transform_3, window_bounds = array<i64: 8, 16>}, {pipeline_mode = #tpu.pipeline_mode<synchronous>, transform_indices = @transform_4, window_bounds = array<i64: 9, 8, 256>}, {pipeline_mode = #tpu.pipeline_mode<synchronous>, transform_indices = @transform_5, window_bounds = array<i64: 8, 8>}, {transform_indices = @transform_6, window_bounds = array<i64: 1, 8, 256>}]} {
    %c0 = arith.constant 0 : index
    %c0_0 = arith.constant 0 : index
    %c0_1 = arith.constant 0 : index
    %0 = vector.load %arg1[%c0, %c0_0, %c0_1] : memref<1x8x256xf32, #tpu.memory_space<vmem>>, vector<1x8x256xf32>
    %1 = vector.shape_cast %0 : vector<1x8x256xf32> to vector<8x256xf32>
    %c0_2 = arith.constant 0 : index
    %c0_3 = arith.constant 0 : index
    %2 = vector.load %arg2[%c0_2, %c0_3] : memref<32x8xf32, #tpu.memory_space<vmem>>, vector<32x8xf32>
    %cst = arith.constant dense<0.000000e+00> : vector<32x256xf32>
    %3 = tpu.matmul %2, %1, %cst {dimension_numbers = #tpu.dot_dimension_numbers<[1], [0], [0], [1], [0, 0, 1, 1], [], []>} : vector<32x8xf32>, vector<8x256xf32>, vector<32x256xf32> -> vector<32x256xf32>
    %cst_4 = arith.constant 0.000000e+00 : f32
    %cst_5 = arith.constant 6.000000e+00 : f32
    %4 = vector.broadcast %cst_4 : f32 to vector<32x256xf32>
    %5 = arith.maximumf %4, %3 : vector<32x256xf32>
    %6 = vector.broadcast %cst_5 : f32 to vector<32x256xf32>
    %7 = arith.minimumf %6, %5 : vector<32x256xf32>
    %c4 = arith.constant 4 : index
    %c0_6 = arith.constant 0 : index
    %c0_7 = arith.constant 0 : index
    %8 = vector.load %arg3[%c4, %c0_6, %c0_7] : memref<9x32x256xf32, #tpu.memory_space<vmem>>, vector<1x32x256xf32>
    %9 = vector.shape_cast %8 : vector<1x32x256xf32> to vector<32x256xf32>
    %10 = arith.mulf %7, %9 : vector<32x256xf32>
    %c34_i32 = arith.constant 34 : i32
    %11 = tpu.dynamic_rotate %7 by %c34_i32 dim 1 : vector<32x256xf32>, i32 -> vector<32x256xf32>
    %c0_8 = arith.constant 0 : index
    %c0_9 = arith.constant 0 : index
    %c0_10 = arith.constant 0 : index
    %12 = vector.load %arg3[%c0_8, %c0_9, %c0_10] : memref<9x32x256xf32, #tpu.memory_space<vmem>>, vector<1x32x256xf32>
    %13 = vector.shape_cast %12 : vector<1x32x256xf32> to vector<32x256xf32>
    %14 = arith.mulf %11, %13 : vector<32x256xf32>
    %15 = arith.addf %10, %14 : vector<32x256xf32>
    %c32_i32 = arith.constant 32 : i32
    %16 = tpu.dynamic_rotate %7 by %c32_i32 dim 1 : vector<32x256xf32>, i32 -> vector<32x256xf32>
    %c1 = arith.constant 1 : index
    %c0_11 = arith.constant 0 : index
    %c0_12 = arith.constant 0 : index
    %17 = vector.load %arg3[%c1, %c0_11, %c0_12] : memref<9x32x256xf32, #tpu.memory_space<vmem>>, vector<1x32x256xf32>
    %18 = vector.shape_cast %17 : vector<1x32x256xf32> to vector<32x256xf32>
    %19 = arith.mulf %16, %18 : vector<32x256xf32>
    %20 = arith.addf %15, %19 : vector<32x256xf32>
    %c30_i32 = arith.constant 30 : i32
    %21 = tpu.dynamic_rotate %7 by %c30_i32 dim 1 : vector<32x256xf32>, i32 -> vector<32x256xf32>
    %c2 = arith.constant 2 : index
    %c0_13 = arith.constant 0 : index
    %c0_14 = arith.constant 0 : index
    %22 = vector.load %arg3[%c2, %c0_13, %c0_14] : memref<9x32x256xf32, #tpu.memory_space<vmem>>, vector<1x32x256xf32>
    %23 = vector.shape_cast %22 : vector<1x32x256xf32> to vector<32x256xf32>
    %24 = arith.mulf %21, %23 : vector<32x256xf32>
    %25 = arith.addf %20, %24 : vector<32x256xf32>
    %c2_i32 = arith.constant 2 : i32
    %26 = tpu.dynamic_rotate %7 by %c2_i32 dim 1 : vector<32x256xf32>, i32 -> vector<32x256xf32>
    %c3 = arith.constant 3 : index
    %c0_15 = arith.constant 0 : index
    %c0_16 = arith.constant 0 : index
    %27 = vector.load %arg3[%c3, %c0_15, %c0_16] : memref<9x32x256xf32, #tpu.memory_space<vmem>>, vector<1x32x256xf32>
    %28 = vector.shape_cast %27 : vector<1x32x256xf32> to vector<32x256xf32>
    %29 = arith.mulf %26, %28 : vector<32x256xf32>
    %30 = arith.addf %25, %29 : vector<32x256xf32>
    %c254_i32 = arith.constant 254 : i32
    %31 = tpu.dynamic_rotate %7 by %c254_i32 dim 1 : vector<32x256xf32>, i32 -> vector<32x256xf32>
    %c5 = arith.constant 5 : index
    %c0_17 = arith.constant 0 : index
    %c0_18 = arith.constant 0 : index
    %32 = vector.load %arg3[%c5, %c0_17, %c0_18] : memref<9x32x256xf32, #tpu.memory_space<vmem>>, vector<1x32x256xf32>
    %33 = vector.shape_cast %32 : vector<1x32x256xf32> to vector<32x256xf32>
    %34 = arith.mulf %31, %33 : vector<32x256xf32>
    %35 = arith.addf %30, %34 : vector<32x256xf32>
    %c226_i32 = arith.constant 226 : i32
    %36 = tpu.dynamic_rotate %7 by %c226_i32 dim 1 : vector<32x256xf32>, i32 -> vector<32x256xf32>
    %c6 = arith.constant 6 : index
    %c0_19 = arith.constant 0 : index
    %c0_20 = arith.constant 0 : index
    %37 = vector.load %arg3[%c6, %c0_19, %c0_20] : memref<9x32x256xf32, #tpu.memory_space<vmem>>, vector<1x32x256xf32>
    %38 = vector.shape_cast %37 : vector<1x32x256xf32> to vector<32x256xf32>
    %39 = arith.mulf %36, %38 : vector<32x256xf32>
    %40 = arith.addf %35, %39 : vector<32x256xf32>
    %c224_i32 = arith.constant 224 : i32
    %41 = tpu.dynamic_rotate %7 by %c224_i32 dim 1 : vector<32x256xf32>, i32 -> vector<32x256xf32>
    %c7 = arith.constant 7 : index
    %c0_21 = arith.constant 0 : index
    %c0_22 = arith.constant 0 : index
    %42 = vector.load %arg3[%c7, %c0_21, %c0_22] : memref<9x32x256xf32, #tpu.memory_space<vmem>>, vector<1x32x256xf32>
    %43 = vector.shape_cast %42 : vector<1x32x256xf32> to vector<32x256xf32>
    %44 = arith.mulf %41, %43 : vector<32x256xf32>
    %45 = arith.addf %40, %44 : vector<32x256xf32>
    %c222_i32 = arith.constant 222 : i32
    %46 = tpu.dynamic_rotate %7 by %c222_i32 dim 1 : vector<32x256xf32>, i32 -> vector<32x256xf32>
    %c8 = arith.constant 8 : index
    %c0_23 = arith.constant 0 : index
    %c0_24 = arith.constant 0 : index
    %47 = vector.load %arg3[%c8, %c0_23, %c0_24] : memref<9x32x256xf32, #tpu.memory_space<vmem>>, vector<1x32x256xf32>
    %48 = vector.shape_cast %47 : vector<1x32x256xf32> to vector<32x256xf32>
    %49 = arith.mulf %46, %48 : vector<32x256xf32>
    %50 = arith.addf %45, %49 : vector<32x256xf32>
    %51 = vector.extract_strided_slice %50 {offsets = [0, 0], sizes = [16, 256], strides = [1, 1]} : vector<32x256xf32> to vector<16x256xf32>
    %52 = vector.extract_strided_slice %50 {offsets = [16, 0], sizes = [16, 256], strides = [1, 1]} : vector<32x256xf32> to vector<16x256xf32>
    %53 = arith.addf %51, %52 : vector<16x256xf32>
    %cst_25 = arith.constant 0.000000e+00 : f32
    %cst_26 = arith.constant 6.000000e+00 : f32
    %54 = vector.broadcast %cst_25 : f32 to vector<16x256xf32>
    %55 = arith.maximumf %54, %53 : vector<16x256xf32>
    %56 = vector.broadcast %cst_26 : f32 to vector<16x256xf32>
    %57 = arith.minimumf %56, %55 : vector<16x256xf32>
    %c0_27 = arith.constant 0 : index
    %c0_28 = arith.constant 0 : index
    %58 = vector.load %arg4[%c0_27, %c0_28] : memref<8x16xf32, #tpu.memory_space<vmem>>, vector<8x16xf32>
    %cst_29 = arith.constant dense<0.000000e+00> : vector<8x256xf32>
    %59 = tpu.matmul %58, %57, %cst_29 {dimension_numbers = #tpu.dot_dimension_numbers<[1], [0], [0], [1], [0, 0, 1, 1], [], []>} : vector<8x16xf32>, vector<16x256xf32>, vector<8x256xf32> -> vector<8x256xf32>
    %c4_30 = arith.constant 4 : index
    %c0_31 = arith.constant 0 : index
    %c0_32 = arith.constant 0 : index
    %60 = vector.load %arg5[%c4_30, %c0_31, %c0_32] : memref<9x8x256xf32, #tpu.memory_space<vmem>>, vector<1x8x256xf32>
    %61 = vector.shape_cast %60 : vector<1x8x256xf32> to vector<8x256xf32>
    %62 = arith.mulf %59, %61 : vector<8x256xf32>
    %c34_i32_33 = arith.constant 34 : i32
    %63 = tpu.dynamic_rotate %59 by %c34_i32_33 dim 1 : vector<8x256xf32>, i32 -> vector<8x256xf32>
    %c0_34 = arith.constant 0 : index
    %c0_35 = arith.constant 0 : index
    %c0_36 = arith.constant 0 : index
    %64 = vector.load %arg5[%c0_34, %c0_35, %c0_36] : memref<9x8x256xf32, #tpu.memory_space<vmem>>, vector<1x8x256xf32>
    %65 = vector.shape_cast %64 : vector<1x8x256xf32> to vector<8x256xf32>
    %66 = arith.mulf %63, %65 : vector<8x256xf32>
    %67 = arith.addf %62, %66 : vector<8x256xf32>
    %c32_i32_37 = arith.constant 32 : i32
    %68 = tpu.dynamic_rotate %59 by %c32_i32_37 dim 1 : vector<8x256xf32>, i32 -> vector<8x256xf32>
    %c1_38 = arith.constant 1 : index
    %c0_39 = arith.constant 0 : index
    %c0_40 = arith.constant 0 : index
    %69 = vector.load %arg5[%c1_38, %c0_39, %c0_40] : memref<9x8x256xf32, #tpu.memory_space<vmem>>, vector<1x8x256xf32>
    %70 = vector.shape_cast %69 : vector<1x8x256xf32> to vector<8x256xf32>
    %71 = arith.mulf %68, %70 : vector<8x256xf32>
    %72 = arith.addf %67, %71 : vector<8x256xf32>
    %c30_i32_41 = arith.constant 30 : i32
    %73 = tpu.dynamic_rotate %59 by %c30_i32_41 dim 1 : vector<8x256xf32>, i32 -> vector<8x256xf32>
    %c2_42 = arith.constant 2 : index
    %c0_43 = arith.constant 0 : index
    %c0_44 = arith.constant 0 : index
    %74 = vector.load %arg5[%c2_42, %c0_43, %c0_44] : memref<9x8x256xf32, #tpu.memory_space<vmem>>, vector<1x8x256xf32>
    %75 = vector.shape_cast %74 : vector<1x8x256xf32> to vector<8x256xf32>
    %76 = arith.mulf %73, %75 : vector<8x256xf32>
    %77 = arith.addf %72, %76 : vector<8x256xf32>
    %c2_i32_45 = arith.constant 2 : i32
    %78 = tpu.dynamic_rotate %59 by %c2_i32_45 dim 1 : vector<8x256xf32>, i32 -> vector<8x256xf32>
    %c3_46 = arith.constant 3 : index
    %c0_47 = arith.constant 0 : index
    %c0_48 = arith.constant 0 : index
    %79 = vector.load %arg5[%c3_46, %c0_47, %c0_48] : memref<9x8x256xf32, #tpu.memory_space<vmem>>, vector<1x8x256xf32>
    %80 = vector.shape_cast %79 : vector<1x8x256xf32> to vector<8x256xf32>
    %81 = arith.mulf %78, %80 : vector<8x256xf32>
    %82 = arith.addf %77, %81 : vector<8x256xf32>
    %c254_i32_49 = arith.constant 254 : i32
    %83 = tpu.dynamic_rotate %59 by %c254_i32_49 dim 1 : vector<8x256xf32>, i32 -> vector<8x256xf32>
    %c5_50 = arith.constant 5 : index
    %c0_51 = arith.constant 0 : index
    %c0_52 = arith.constant 0 : index
    %84 = vector.load %arg5[%c5_50, %c0_51, %c0_52] : memref<9x8x256xf32, #tpu.memory_space<vmem>>, vector<1x8x256xf32>
    %85 = vector.shape_cast %84 : vector<1x8x256xf32> to vector<8x256xf32>
    %86 = arith.mulf %83, %85 : vector<8x256xf32>
    %87 = arith.addf %82, %86 : vector<8x256xf32>
    %c226_i32_53 = arith.constant 226 : i32
    %88 = tpu.dynamic_rotate %59 by %c226_i32_53 dim 1 : vector<8x256xf32>, i32 -> vector<8x256xf32>
    %c6_54 = arith.constant 6 : index
    %c0_55 = arith.constant 0 : index
    %c0_56 = arith.constant 0 : index
    %89 = vector.load %arg5[%c6_54, %c0_55, %c0_56] : memref<9x8x256xf32, #tpu.memory_space<vmem>>, vector<1x8x256xf32>
    %90 = vector.shape_cast %89 : vector<1x8x256xf32> to vector<8x256xf32>
    %91 = arith.mulf %88, %90 : vector<8x256xf32>
    %92 = arith.addf %87, %91 : vector<8x256xf32>
    %c224_i32_57 = arith.constant 224 : i32
    %93 = tpu.dynamic_rotate %59 by %c224_i32_57 dim 1 : vector<8x256xf32>, i32 -> vector<8x256xf32>
    %c7_58 = arith.constant 7 : index
    %c0_59 = arith.constant 0 : index
    %c0_60 = arith.constant 0 : index
    %94 = vector.load %arg5[%c7_58, %c0_59, %c0_60] : memref<9x8x256xf32, #tpu.memory_space<vmem>>, vector<1x8x256xf32>
    %95 = vector.shape_cast %94 : vector<1x8x256xf32> to vector<8x256xf32>
    %96 = arith.mulf %93, %95 : vector<8x256xf32>
    %97 = arith.addf %92, %96 : vector<8x256xf32>
    %c222_i32_61 = arith.constant 222 : i32
    %98 = tpu.dynamic_rotate %59 by %c222_i32_61 dim 1 : vector<8x256xf32>, i32 -> vector<8x256xf32>
    %c8_62 = arith.constant 8 : index
    %c0_63 = arith.constant 0 : index
    %c0_64 = arith.constant 0 : index
    %99 = vector.load %arg5[%c8_62, %c0_63, %c0_64] : memref<9x8x256xf32, #tpu.memory_space<vmem>>, vector<1x8x256xf32>
    %100 = vector.shape_cast %99 : vector<1x8x256xf32> to vector<8x256xf32>
    %101 = arith.mulf %98, %100 : vector<8x256xf32>
    %102 = arith.addf %97, %101 : vector<8x256xf32>
    %cst_65 = arith.constant 0.000000e+00 : f32
    %cst_66 = arith.constant 6.000000e+00 : f32
    %103 = vector.broadcast %cst_65 : f32 to vector<8x256xf32>
    %104 = arith.maximumf %103, %102 : vector<8x256xf32>
    %105 = vector.broadcast %cst_66 : f32 to vector<8x256xf32>
    %106 = arith.minimumf %105, %104 : vector<8x256xf32>
    %c0_67 = arith.constant 0 : index
    %c0_68 = arith.constant 0 : index
    %107 = vector.load %arg6[%c0_67, %c0_68] : memref<8x8xf32, #tpu.memory_space<vmem>>, vector<8x8xf32>
    %cst_69 = arith.constant dense<0.000000e+00> : vector<8x256xf32>
    %108 = tpu.matmul %107, %106, %cst_69 {dimension_numbers = #tpu.dot_dimension_numbers<[1], [0], [0], [1], [0, 0, 1, 1], [], []>} : vector<8x8xf32>, vector<8x256xf32>, vector<8x256xf32> -> vector<8x256xf32>
    %c0_70 = arith.constant 0 : index
    %c0_71 = arith.constant 0 : index
    %c0_72 = arith.constant 0 : index
    %109 = vector.load %arg1[%c0_70, %c0_71, %c0_72] : memref<1x8x256xf32, #tpu.memory_space<vmem>>, vector<1x8x256xf32>
    %110 = vector.shape_cast %109 : vector<1x8x256xf32> to vector<8x256xf32>
    %111 = arith.addf %108, %110 : vector<8x256xf32>
    %c0_73 = arith.constant 0 : index
    %c0_74 = arith.constant 0 : index
    %c0_75 = arith.constant 0 : index
    %112 = vector.load %arg7[%c0_73, %c0_74, %c0_75] : memref<1x8x256xf32, #tpu.memory_space<vmem>>, vector<1x8x256xf32>
    %113 = vector.shape_cast %112 : vector<1x8x256xf32> to vector<8x256xf32>
    %114 = vector.shape_cast %111 : vector<8x256xf32> to vector<1x8x256xf32>
    tpu.vector_store %arg7[%c0_73, %c0_74, %c0_75], %114 {strides = array<i32>} : memref<1x8x256xf32, #tpu.memory_space<vmem>>, vector<1x8x256xf32>,
    return
  }
  func.func @transform_0(%arg0: i32) -> (i32, i32, i32) {
    %c0_i32 = arith.constant 0 : i32
    %c0_i32_0 = arith.constant 0 : i32
    %c0_i32_1 = arith.constant 0 : i32
    return %arg0, %c0_i32, %c0_i32_0 : i32, i32, i32
  }
  func.func @transform_1(%arg0: i32) -> (i32, i32) {
    %c0_i32 = arith.constant 0 : i32
    %c0_i32_0 = arith.constant 0 : i32
    %c0_i32_1 = arith.constant 0 : i32
    return %c0_i32, %c0_i32_0 : i32, i32
  }
  func.func @transform_2(%arg0: i32) -> (i32, i32, i32) {
    %c0_i32 = arith.constant 0 : i32
    %c0_i32_0 = arith.constant 0 : i32
    %c0_i32_1 = arith.constant 0 : i32
    %c0_i32_2 = arith.constant 0 : i32
    return %c0_i32, %c0_i32_0, %c0_i32_1 : i32, i32, i32
  }
  func.func @transform_3(%arg0: i32) -> (i32, i32) {
    %c0_i32 = arith.constant 0 : i32
    %c0_i32_0 = arith.constant 0 : i32
    %c0_i32_1 = arith.constant 0 : i32
    return %c0_i32, %c0_i32_0 : i32, i32
  }
  func.func @transform_4(%arg0: i32) -> (i32, i32, i32) {
    %c0_i32 = arith.constant 0 : i32
    %c0_i32_0 = arith.constant 0 : i32
    %c0_i32_1 = arith.constant 0 : i32
    %c0_i32_2 = arith.constant 0 : i32
    return %c0_i32, %c0_i32_0, %c0_i32_1 : i32, i32, i32
  }
  func.func @transform_5(%arg0: i32) -> (i32, i32) {
    %c0_i32 = arith.constant 0 : i32
    %c0_i32_0 = arith.constant 0 : i32
    %c0_i32_1 = arith.constant 0 : i32
    return %c0_i32, %c0_i32_0 : i32, i32
  }
  func.func @transform_6(%arg0: i32) -> (i32, i32, i32) {
    %c0_i32 = arith.constant 0 : i32
    %c0_i32_0 = arith.constant 0 : i32
    %c0_i32_1 = arith.constant 0 : i32
    return %arg0, %c0_i32, %c0_i32_0 : i32, i32, i32
  }
}

</mosaic_0001>

<llo_original>
// kernel: tpu_custom_call.1
$region0: #{tpu_custom_call.1}
  #allocation0 [shape = 'u32[]', space=smem, size = 0x4, offset = 0x4, fixed_abs, tag = 'smem constant byte address 0x4 - core index']
  #allocation1 [shape = 'u32[144,128]{1,0:T(1,128)}', space=vmem, size = 0x12000, scoped, tag = 'internal scratch']
  %s0 = inlined_call_operand.vmem [shape: f32[1,8,256], index: 0, kind: input, shape index: {}]
  %s1 = inlined_call_operand.vmem [shape: f32[32,8], index: 1, kind: input, shape index: {}]
  %s2 = inlined_call_operand.hbm [shape: f32[9,32,256], index: 2, kind: input, shape index: {}]
  %s3 = inlined_call_operand.vmem [shape: f32[8,16], index: 3, kind: input, shape index: {}]
  %s4 = inlined_call_operand.hbm [shape: f32[9,8,256], index: 4, kind: input, shape index: {}]
  %s5 = inlined_call_operand.vmem [shape: f32[8,8], index: 5, kind: input, shape index: {}]
  %s6 = inlined_call_operand.hbm [shape: f32[1,8,256], index: 6, kind: output, shape index: {}]
  %s7 = sld [smem:[#allocation0]]
  $region42: #{tpu_custom_call.1} parent=0
    _
  %s9 = ssub.s32 1, %s7
  %s10 = scalar_select 0, %s9, %s7
  $region1: #{tpu_custom_call.1} parent=0
    #allocation2 [shape = 'u8[294912]{0}', space=vmem, size = 0x48000, scoped, tag = 'input window, operand 2, single buffered']
    #allocation3 [shape = 's32[1]{0}', space=sflag, size = 0x4, scoped, tag = 'scoped memory for tpu_custom_call.1']
    #allocation4 [shape = 's32[1]{0}', space=sflag, size = 0x4, scoped, tag = 'scoped memory for tpu_custom_call.1']
    #allocation5 [shape = 'u8[73728]{0}', space=vmem, size = 0x12000, scoped, tag = 'input window, operand 4, single buffered']
    #allocation6 [shape = 's32[1]{0}', space=sflag, size = 0x4, scoped, tag = 'scoped memory for tpu_custom_call.1']
    #allocation7 [shape = 'u8[8192]{0}', space=vmem, size = 0x2000, scoped, tag = 'output window, operand 0, single buffered']
    %11 = vsyncpa [#allocation3], 0
    %12 = vsyncpa [#allocation6], 0
    %13 = vsyncpa [#allocation4], 0
    // Predicated region
    $region2: #{tpu_custom_call.1} parent=1 // pred_check
      _
    $region3: #{tpu_custom_call.1} parent=1 // pred_check_branch
      %15 = sbr.rel (0) target = $region5
    $region4: #{tpu_custom_call.1} parent=1 // pred_region
      _
    $region5: #{tpu_custom_call.1} parent=1 // pred_fallthru
      _
    // Predicated region
    $region6: #{tpu_custom_call.1} parent=1 // pred_check
      _
    $region7: #{tpu_custom_call.1} parent=1 // pred_check_branch
      %17 = sbr.rel (0) target = $region9
    $region8: #{tpu_custom_call.1} parent=1 // pred_region
      _
    $region9: #{tpu_custom_call.1} parent=1 // pred_fallthru
      _
    // Predicated region
    $region10: #{tpu_custom_call.1} parent=1 // pred_check
      _
    $region11: #{tpu_custom_call.1} parent=1 // pred_check_branch
      %19 = sbr.rel (0) target = $region13
    $region12: #{tpu_custom_call.1} parent=1 // pred_region
      %s21 = ssub.s32 9216, 9216
      %22 = vsyncadd [#allocation3], %s21
      %s23 = sshll.u32 [#allocation2], 4
      %s24 = int_to_ptr.vmem [resolvable:$true] %s23
      %29 = dma.hbm_to_vmem [thread:$0]  %s2, 9216, %s24, [#allocation3], 256, 256, 16
    $region13: #{tpu_custom_call.1} parent=1 // pred_fallthru
      _
    // Predicated region
    $region14: #{tpu_custom_call.1} parent=1 // pred_check
      _
    $region15: #{tpu_custom_call.1} parent=1 // pred_check_branch
      %31 = sbr.rel (0) target = $region17
    $region16: #{tpu_custom_call.1} parent=1 // pred_region
      _
    $region17: #{tpu_custom_call.1} parent=1 // pred_fallthru
      _
    // Predicated region
    $region18: #{tpu_custom_call.1} parent=1 // pred_check
      _
    $region19: #{tpu_custom_call.1} parent=1 // pred_check_branch
      %33 = sbr.rel (0) target = $region21
    $region20: #{tpu_custom_call.1} parent=1 // pred_region
      %s35 = ssub.s32 2304, 2304
      %36 = vsyncadd [#allocation6], %s35
      %s37 = sshll.u32 [#allocation5], 4
      %s38 = int_to_ptr.vmem [resolvable:$true] %s37
      %43 = dma.hbm_to_vmem [thread:$0]  %s4, 2304, %s38, [#allocation6], 256, 256, 16
    $region21: #{tpu_custom_call.1} parent=1 // pred_fallthru
      _
    // Predicated region
    $region22: #{tpu_custom_call.1} parent=1 // pred_check
      _
    $region23: #{tpu_custom_call.1} parent=1 // pred_check_branch
      %45 = sbr.rel (0) target = $region25
    $region24: #{tpu_custom_call.1} parent=1 // pred_region
      _
    $region25: #{tpu_custom_call.1} parent=1 // pred_fallthru
      _
    // Predicated region
    $region26: #{tpu_custom_call.1} parent=1 // pred_check
      _
    $region27: #{tpu_custom_call.1} parent=1 // pred_check_branch
      %47 = sbr.rel (0) target = $region29
    $region28: #{tpu_custom_call.1} parent=1 // pred_region
      %48 = dma.done [#allocation3], 9216
    $region29: #{tpu_custom_call.1} parent=1 // pred_fallthru
      _
    // Predicated region
    $region30: #{tpu_custom_call.1} parent=1 // pred_check
      _
    $region31: #{tpu_custom_call.1} parent=1 // pred_check_branch
      %50 = sbr.rel (0) target = $region33
    $region32: #{tpu_custom_call.1} parent=1 // pred_region
      %51 = dma.done [#allocation6], 2304
    $region33: #{tpu_custom_call.1} parent=1 // pred_fallthru
      _
    %v52 = vld [vmem:[%s0] sm:$0xff]
    %v53 = vld [vmem:[%s0 + $0x8] sm:$0xff]
    %v54 = vld [vmem:[%s1] sm:$0xff]
    %v55 = vld [vmem:[%s1 + $0x8] sm:$0xff]
    %v56 = vld [vmem:[%s1 + $0x10] sm:$0xff]
    %v57 = vld [vmem:[%s1 + $0x18] sm:$0xff]
    %vm58 = vcmask 64512
    %v60 = vsel %vm58, %v54, 0
    %v63 = vsel %vm58, %v55, 0
    %v66 = vsel %vm58, %v56, 0
    %v69 = vsel %vm58, %v57, 0
    %71 = vmatprep.subr.mxu0 0.0
    %72 = vmatpush1.msra.mxu0 0.0
    %73 = vmatprep.subr.mxu0 0.0
    %74 = vmatpush1.msra.mxu0 0.0
    %75 = vmatprep.subr.mxu0 0.0
    %76 = vmatpush1.msra.mxu0 0.0
    %77 = vmatprep.subr.mxu0 0.0
    %78 = vmatpush1.msra.mxu0 0.0
    %79 = vmatprep.subr.mxu0 0.0
    %80 = vmatpush1.msra.mxu0 0.0
    %81 = vmatprep.subr.mxu0 0.0
    %82 = vmatpush1.msra.mxu0 0.0
    %83 = vmatprep.subr.mxu0 0.0
    %84 = vmatpush1.msra.mxu0 0.0
    %85 = vmatprep.subr.mxu0 0.0
    %86 = vmatpush1.msra.mxu0 0.0
    %87 = vmatprep.subr.mxu0 0.0
    %88 = vmatpush1.msra.mxu0 0.0
    %89 = vmatprep.subr.mxu0 0.0
    %90 = vmatpush1.msra.mxu0 0.0
    %91 = vmatprep.subr.mxu0 0.0
    %92 = vmatpush1.msra.mxu0 0.0
    %93 = vmatprep.subr.mxu0 0.0
    %94 = vmatpush1.msra.mxu0 0.0
    %95 = vmatprep.subr.mxu0 0.0
    %96 = vmatpush1.msra.mxu0 0.0
    %97 = vmatprep.subr.mxu0 0.0
    %98 = vmatpush1.msra.mxu0 0.0
    %99 = vmatprep.subr.mxu0 0.0
    %100 = vmatpush1.msra.mxu0 0.0
    %101 = vmatprep.subr.mxu0 %v53
    %102 = vmatpush1.msra.mxu0 %v52
    %103 = vmatprep.subr.mxu0 0.0
    %104 = vmatpush2.msra.mxu0 0.0
    %105 = vmatprep.subr.mxu0 0.0
    %106 = vmatpush2.msra.mxu0 0.0
    %107 = vmatprep.subr.mxu0 0.0
    %108 = vmatpush2.msra.mxu0 0.0
    %109 = vmatprep.subr.mxu0 0.0
    %110 = vmatpush2.msra.mxu0 0.0
    %111 = vmatprep.subr.mxu0 0.0
    %112 = vmatpush2.msra.mxu0 0.0
    %113 = vmatprep.subr.mxu0 0.0
    %114 = vmatpush2.msra.mxu0 0.0
    %115 = vmatprep.subr.mxu0 0.0
    %116 = vmatpush2.msra.mxu0 0.0
    %117 = vmatprep.subr.mxu0 0.0
    %118 = vmatpush2.msra.mxu0 0.0
    %119 = vmatprep.subr.mxu0 0.0
    %120 = vmatpush2.msra.mxu0 0.0
    %121 = vmatprep.subr.mxu0 0.0
    %122 = vmatpush2.msra.mxu0 0.0
    %123 = vmatprep.subr.mxu0 0.0
    %124 = vmatpush2.msra.mxu0 0.0
    %125 = vmatprep.subr.mxu0 0.0
    %126 = vmatpush2.msra.mxu0 0.0
    %127 = vmatprep.subr.mxu0 0.0
    %128 = vmatpush2.msra.mxu0 0.0
    %129 = vmatprep.subr.mxu0 0.0
    %130 = vmatpush2.msra.mxu0 0.0
    %131 = vmatprep.subr.mxu0 0.0
    %132 = vmatpush2.msra.mxu0 0.0
    %133 = vmatprep.subr.mxu0 0.0
    %134 = vmatpush2.msra.mxu0 0.0
    %135 = vmatprep.mubr.f32.mxu0 0.0
    %136 = vmatmul.mubr.f32.gmra.mxu0 %v60
    %v137 = vpop.f32.mrf.mxu0
    %v138 = vadd.f32 0.0, %v137
    %v139 = vpop.f32.mrf.mxu0
    %v140 = vadd.f32 0.0, %v139
    %141 = vmatprep.mubr.f32.mxu0 0.0
    %142 = vmatmul.mubr.f32.gmra.mxu0 %v63
    %v143 = vpop.f32.mrf.mxu0
    %v144 = vadd.f32 0.0, %v143
    %v145 = vpop.f32.mrf.mxu0
    %v146 = vadd.f32 0.0, %v145
    %147 = vmatprep.mubr.f32.mxu0 0.0
    %148 = vmatmul.mubr.f32.gmra.mxu0 %v66
    %v149 = vpop.f32.mrf.mxu0
    %v150 = vadd.f32 0.0, %v149
    %v151 = vpop.f32.mrf.mxu0
    %v152 = vadd.f32 0.0, %v151
    %153 = vmatprep.mubr.f32.mxu0 0.0
    %154 = vmatmul.mubr.f32.gmra.mxu0 %v69
    %v155 = vpop.f32.mrf.mxu0
    %v156 = vadd.f32 0.0, %v155
    %v157 = vpop.f32.mrf.mxu0
    %v158 = vadd.f32 0.0, %v157
    %159 = vdwg.mxu0
    %v160 = vmax.f32 %v138, 0.0
    %v161 = vmax.f32 %v140, 0.0
    %v162 = vmax.f32 %v144, 0.0
    %v163 = vmax.f32 %v146, 0.0
    %v164 = vmax.f32 %v150, 0.0
    %v165 = vmax.f32 %v152, 0.0
    %v166 = vmax.f32 %v156, 0.0
    %v167 = vmax.f32 %v158, 0.0
    %v168 = vmin.f32 %v160, 6.0
    %v169 = vmin.f32 %v161, 6.0
    %v170 = vmin.f32 %v162, 6.0
    %v171 = vmin.f32 %v163, 6.0
    %v172 = vmin.f32 %v164, 6.0
    %v173 = vmin.f32 %v165, 6.0
    %v174 = vmin.f32 %v166, 6.0
    %v175 = vmin.f32 %v167, 6.0
    %s176 = scalar_lea.vmem [#allocation2], 256
    %v177 = vld [vmem:[%s176] sm:$0xff]
    %v178 = vld [vmem:[%s176 + $0x8] sm:$0xff]
    %v179 = vld [vmem:[%s176 + $0x10] sm:$0xff]
    %v180 = vld [vmem:[%s176 + $0x18] sm:$0xff]
    %v181 = vld [vmem:[%s176 + $0x20] sm:$0xff]
    %v182 = vld [vmem:[%s176 + $0x28] sm:$0xff]
    %v183 = vld [vmem:[%s176 + $0x30] sm:$0xff]
    %v184 = vld [vmem:[%s176 + $0x38] sm:$0xff]
    %v185 = vmul.f32 %v168, %v177
    %v186 = vmul.f32 %v169, %v178
    %v187 = vmul.f32 %v170, %v179
    %v188 = vmul.f32 %v171, %v180
    %v189 = vmul.f32 %v172, %v181
    %v190 = vmul.f32 %v173, %v182
    %v191 = vmul.f32 %v174, %v183
    %v192 = vmul.f32 %v175, %v184
    %193 = vrot.lane.b32.xlu0 %v168, 34
    %v194 = vpop.permute.xlu0 %193
    %195 = vrot.lane.b32.xlu0 %v170, 34
    %v196 = vpop.permute.xlu0 %195
    %197 = vrot.lane.b32.xlu0 %v172, 34
    %v198 = vpop.permute.xlu0 %197
    %199 = vrot.lane.b32.xlu0 %v174, 34
    %v200 = vpop.permute.xlu0 %199
    %201 = vrot.lane.b32.xlu0 %v169, 34
    %v202 = vpop.permute.xlu0 %201
    %203 = vrot.lane.b32.xlu0 %v171, 34
    %v204 = vpop.permute.xlu0 %203
    %205 = vrot.lane.b32.xlu0 %v173, 34
    %v206 = vpop.permute.xlu0 %205
    %207 = vrot.lane.b32.xlu0 %v175, 34
    %v208 = vpop.permute.xlu0 %207
    %v209 = vlaneseq
    %v210 = vand.u32 %v209, 127
    %vm211 = vcmp.lt.s32.totalorder %v210, 34
    %v212 = vsel %vm211, %v194, %v202
    %v213 = vsel %vm211, %v196, %v204
    %v214 = vsel %vm211, %v198, %v206
    %v215 = vsel %vm211, %v200, %v208
    %v216 = vsel %vm211, %v202, %v194
    %v217 = vsel %vm211, %v204, %v196
    %v218 = vsel %vm211, %v206, %v198
    %v219 = vsel %vm211, %v208, %v200
    %v220 = vld [vmem:[#allocation2] sm:$0xff]
    %v221 = vld [vmem:[#allocation2 + $0x8] sm:$0xff]
    %v222 = vld [vmem:[#allocation2 + $0x10] sm:$0xff]
    %v223 = vld [vmem:[#allocation2 + $0x18] sm:$0xff]
    %v224 = vld [vmem:[#allocation2 + $0x20] sm:$0xff]
    %v225 = vld [vmem:[#allocation2 + $0x28] sm:$0xff]
    %v226 = vld [vmem:[#allocation2 + $0x30] sm:$0xff]
    %v227 = vld [vmem:[#allocation2 + $0x38] sm:$0xff]
    %v228 = vmul.f32 %v216, %v220
    %v229 = vmul.f32 %v212, %v221
    %v230 = vmul.f32 %v217, %v222
    %v231 = vmul.f32 %v213, %v223
    %v232 = vmul.f32 %v218, %v224
    %v233 = vmul.f32 %v214, %v225
    %v234 = vmul.f32 %v219, %v226
    %v235 = vmul.f32 %v215, %v227
    %v236 = vadd.f32 %v185, %v228
    %v237 = vadd.f32 %v186, %v229
    %v238 = vadd.f32 %v187, %v230
    %v239 = vadd.f32 %v188, %v231
    %v240 = vadd.f32 %v189, %v232
    %v241 = vadd.f32 %v190, %v233
    %v242 = vadd.f32 %v191, %v234
    %v243 = vadd.f32 %v192, %v235
    %244 = vrot.lane.b32.xlu0 %v168, 32
    %v245 = vpop.permute.xlu0 %244
    %246 = vrot.lane.b32.xlu0 %v170, 32
    %v247 = vpop.permute.xlu0 %246
    %248 = vrot.lane.b32.xlu0 %v172, 32
    %v249 = vpop.permute.xlu0 %248
    %250 = vrot.lane.b32.xlu0 %v174, 32
    %v251 = vpop.permute.xlu0 %250
    %252 = vrot.lane.b32.xlu0 %v169, 32
    %v253 = vpop.permute.xlu0 %252
    %254 = vrot.lane.b32.xlu0 %v171, 32
    %v255 = vpop.permute.xlu0 %254
    %256 = vrot.lane.b32.xlu0 %v173, 32
    %v257 = vpop.permute.xlu0 %256
    %258 = vrot.lane.b32.xlu0 %v175, 32
    %v259 = vpop.permute.xlu0 %258
    %vm260 = vcmp.lt.s32.totalorder %v210, 32
    %v261 = vsel %vm260, %v245, %v253
    %v262 = vsel %vm260, %v247, %v255
    %v263 = vsel %vm260, %v249, %v257
    %v264 = vsel %vm260, %v251, %v259
    %v265 = vsel %vm260, %v253, %v245
    %v266 = vsel %vm260, %v255, %v247
    %v267 = vsel %vm260, %v257, %v249
    %v268 = vsel %vm260, %v259, %v251
    %s269 = scalar_lea.vmem [#allocation2], 64
    %v270 = vld [vmem:[%s269] sm:$0xff]
    %v271 = vld [vmem:[%s269 + $0x8] sm:$0xff]
    %v272 = vld [vmem:[%s269 + $0x10] sm:$0xff]
    %v273 = vld [vmem:[%s269 + $0x18] sm:$0xff]
    %v274 = vld [vmem:[%s269 + $0x20] sm:$0xff]
    %v275 = vld [vmem:[%s269 + $0x28] sm:$0xff]
    %v276 = vld [vmem:[%s269 + $0x30] sm:$0xff]
    %v277 = vld [vmem:[%s269 + $0x38] sm:$0xff]
    %v278 = vmul.f32 %v265, %v270
    %v279 = vmul.f32 %v261, %v271
    %v280 = vmul.f32 %v266, %v272
    %v281 = vmul.f32 %v262, %v273
    %v282 = vmul.f32 %v267, %v274
    %v283 = vmul.f32 %v263, %v275
    %v284 = vmul.f32 %v268, %v276
    %v285 = vmul.f32 %v264, %v277
    %v286 = vadd.f32 %v236, %v278
    %v287 = vadd.f32 %v237, %v279
    %v288 = vadd.f32 %v238, %v280
    %v289 = vadd.f32 %v239, %v281
    %v290 = vadd.f32 %v240, %v282
    %v291 = vadd.f32 %v241, %v283
    %v292 = vadd.f32 %v242, %v284
    %v293 = vadd.f32 %v243, %v285
    %294 = vrot.lane.b32.xlu0 %v168, 30
    %v295 = vpop.permute.xlu0 %294
    %296 = vrot.lane.b32.xlu0 %v170, 30
    %v297 = vpop.permute.xlu0 %296
    %298 = vrot.lane.b32.xlu0 %v172, 30
    %v299 = vpop.permute.xlu0 %298
    %300 = vrot.lane.b32.xlu0 %v174, 30
    %v301 = vpop.permute.xlu0 %300
    %302 = vrot.lane.b32.xlu0 %v169, 30
    %v303 = vpop.permute.xlu0 %302
    %304 = vrot.lane.b32.xlu0 %v171, 30
    %v305 = vpop.permute.xlu0 %304
    %306 = vrot.lane.b32.xlu0 %v173, 30
    %v307 = vpop.permute.xlu0 %306
    %308 = vrot.lane.b32.xlu0 %v175, 30
    %v309 = vpop.permute.xlu0 %308
    %vm310 = vcmp.lt.s32.totalorder %v210, 30
    %v311 = vsel %vm310, %v295, %v303
    %v312 = vsel %vm310, %v297, %v305
    %v313 = vsel %vm310, %v299, %v307
    %v314 = vsel %vm310, %v301, %v309
    %v315 = vsel %vm310, %v303, %v295
    %v316 = vsel %vm310, %v305, %v297
    %v317 = vsel %vm310, %v307, %v299
    %v318 = vsel %vm310, %v309, %v301
    %s319 = scalar_lea.vmem [#allocation2], 128
    %v320 = vld [vmem:[%s319] sm:$0xff]
    %v321 = vld [vmem:[%s319 + $0x8] sm:$0xff]
    %v322 = vld [vmem:[%s319 + $0x10] sm:$0xff]
    %v323 = vld [vmem:[%s319 + $0x18] sm:$0xff]
    %v324 = vld [vmem:[%s319 + $0x20] sm:$0xff]
    %v325 = vld [vmem:[%s319 + $0x28] sm:$0xff]
    %v326 = vld [vmem:[%s319 + $0x30] sm:$0xff]
    %v327 = vld [vmem:[%s319 + $0x38] sm:$0xff]
    %v328 = vmul.f32 %v315, %v320
    %v329 = vmul.f32 %v311, %v321
    %v330 = vmul.f32 %v316, %v322
    %v331 = vmul.f32 %v312, %v323
    %v332 = vmul.f32 %v317, %v324
    %v333 = vmul.f32 %v313, %v325
    %v334 = vmul.f32 %v318, %v326
    %v335 = vmul.f32 %v314, %v327
    %v336 = vadd.f32 %v286, %v328
    %v337 = vadd.f32 %v287, %v329
    %v338 = vadd.f32 %v288, %v330
    %v339 = vadd.f32 %v289, %v331
    %v340 = vadd.f32 %v290, %v332
    %v341 = vadd.f32 %v291, %v333
    %v342 = vadd.f32 %v292, %v334
    %v343 = vadd.f32 %v293, %v335
    %344 = vrot.lane.b32.xlu0 %v168, 2
    %v345 = vpop.permute.xlu0 %344
    %346 = vrot.lane.b32.xlu0 %v170, 2
    %v347 = vpop.permute.xlu0 %346
    %348 = vrot.lane.b32.xlu0 %v172, 2
    %v349 = vpop.permute.xlu0 %348
    %350 = vrot.lane.b32.xlu0 %v174, 2
    %v351 = vpop.permute.xlu0 %350
    %352 = vrot.lane.b32.xlu0 %v169, 2
    %v353 = vpop.permute.xlu0 %352
    %354 = vrot.lane.b32.xlu0 %v171, 2
    %v355 = vpop.permute.xlu0 %354
    %356 = vrot.lane.b32.xlu0 %v173, 2
    %v357 = vpop.permute.xlu0 %356
    %358 = vrot.lane.b32.xlu0 %v175, 2
    %v359 = vpop.permute.xlu0 %358
    %vm360 = vcmp.lt.s32.totalorder %v210, 2
    %v361 = vsel %vm360, %v345, %v353
    %v362 = vsel %vm360, %v347, %v355
    %v363 = vsel %vm360, %v349, %v357
    %v364 = vsel %vm360, %v351, %v359
    %v365 = vsel %vm360, %v353, %v345
    %v366 = vsel %vm360, %v355, %v347
    %v367 = vsel %vm360, %v357, %v349
    %v368 = vsel %vm360, %v359, %v351
    %s369 = scalar_lea.vmem [#allocation2], 192
    %v370 = vld [vmem:[%s369] sm:$0xff]
    %v371 = vld [vmem:[%s369 + $0x8] sm:$0xff]
    %v372 = vld [vmem:[%s369 + $0x10] sm:$0xff]
    %v373 = vld [vmem:[%s369 + $0x18] sm:$0xff]
    %v374 = vld [vmem:[%s369 + $0x20] sm:$0xff]
    %v375 = vld [vmem:[%s369 + $0x28] sm:$0xff]
    %v376 = vld [vmem:[%s369 + $0x30] sm:$0xff]
    %v377 = vld [vmem:[%s369 + $0x38] sm:$0xff]
    %v378 = vmul.f32 %v365, %v370
    %v379 = vmul.f32 %v361, %v371
    %v380 = vmul.f32 %v366, %v372
    %v381 = vmul.f32 %v362, %v373
    %v382 = vmul.f32 %v367, %v374
    %v383 = vmul.f32 %v363, %v375
    %v384 = vmul.f32 %v368, %v376
    %v385 = vmul.f32 %v364, %v377
    %v386 = vadd.f32 %v336, %v378
    %v387 = vadd.f32 %v337, %v379
    %v388 = vadd.f32 %v338, %v380
    %v389 = vadd.f32 %v339, %v381
    %v390 = vadd.f32 %v340, %v382
    %v391 = vadd.f32 %v341, %v383
    %v392 = vadd.f32 %v342, %v384
    %v393 = vadd.f32 %v343, %v385
    %394 = vrot.lane.b32.xlu0 %v168, 126
    %v395 = vpop.permute.xlu0 %394
    %396 = vrot.lane.b32.xlu0 %v170, 126
    %v397 = vpop.permute.xlu0 %396
    %398 = vrot.lane.b32.xlu0 %v172, 126
    %v399 = vpop.permute.xlu0 %398
    %400 = vrot.lane.b32.xlu0 %v174, 126
    %v401 = vpop.permute.xlu0 %400
    %402 = vrot.lane.b32.xlu0 %v169, 126
    %v403 = vpop.permute.xlu0 %402
    %404 = vrot.lane.b32.xlu0 %v171, 126
    %v405 = vpop.permute.xlu0 %404
    %406 = vrot.lane.b32.xlu0 %v173, 126
    %v407 = vpop.permute.xlu0 %406
    %408 = vrot.lane.b32.xlu0 %v175, 126
    %v409 = vpop.permute.xlu0 %408
    %vm410 = vcmp.lt.s32.totalorder %v210, 126
    %v411 = vsel %vm410, %v395, %v403
    %v412 = vsel %vm410, %v397, %v405
    %v413 = vsel %vm410, %v399, %v407
    %v414 = vsel %vm410, %v401, %v409
    %v415 = vsel %vm410, %v403, %v395
    %v416 = vsel %vm410, %v405, %v397
    %v417 = vsel %vm410, %v407, %v399
    %v418 = vsel %vm410, %v409, %v401
    %s419 = scalar_lea.vmem [#allocation2], 320
    %v420 = vld [vmem:[%s419] sm:$0xff]
    %v421 = vld [vmem:[%s419 + $0x8] sm:$0xff]
    %v422 = vld [vmem:[%s419 + $0x10] sm:$0xff]
    %v423 = vld [vmem:[%s419 + $0x18] sm:$0xff]
    %v424 = vld [vmem:[%s419 + $0x20] sm:$0xff]
    %v425 = vld [vmem:[%s419 + $0x28] sm:$0xff]
    %v426 = vld [vmem:[%s419 + $0x30] sm:$0xff]
    %v427 = vld [vmem:[%s419 + $0x38] sm:$0xff]
    %v428 = vmul.f32 %v411, %v420
    %v429 = vmul.f32 %v415, %v421
    %v430 = vmul.f32 %v412, %v422
    %v431 = vmul.f32 %v416, %v423
    %v432 = vmul.f32 %v413, %v424
    %v433 = vmul.f32 %v417, %v425
    %v434 = vmul.f32 %v414, %v426
    %v435 = vmul.f32 %v418, %v427
    %v436 = vadd.f32 %v386, %v428
    %v437 = vadd.f32 %v387, %v429
    %v438 = vadd.f32 %v388, %v430
    %v439 = vadd.f32 %v389, %v431
    %v440 = vadd.f32 %v390, %v432
    %v441 = vadd.f32 %v391, %v433
    %v442 = vadd.f32 %v392, %v434
    %v443 = vadd.f32 %v393, %v435
    %444 = vrot.lane.b32.xlu0 %v168, 98
    %v445 = vpop.permute.xlu0 %444
    %446 = vrot.lane.b32.xlu0 %v170, 98
    %v447 = vpop.permute.xlu0 %446
    %448 = vrot.lane.b32.xlu0 %v172, 98
    %v449 = vpop.permute.xlu0 %448
    %450 = vrot.lane.b32.xlu0 %v174, 98
    %v451 = vpop.permute.xlu0 %450
    %452 = vrot.lane.b32.xlu0 %v169, 98
    %v453 = vpop.permute.xlu0 %452
    %454 = vrot.lane.b32.xlu0 %v171, 98
    %v455 = vpop.permute.xlu0 %454
    %456 = vrot.lane.b32.xlu0 %v173, 98
    %v457 = vpop.permute.xlu0 %456
    %458 = vrot.lane.b32.xlu0 %v175, 98
    %v459 = vpop.permute.xlu0 %458
    %vm460 = vcmp.lt.s32.totalorder %v210, 98
    %v461 = vsel %vm460, %v445, %v453
    %v462 = vsel %vm460, %v447, %v455
    %v463 = vsel %vm460, %v449, %v457
    %v464 = vsel %vm460, %v451, %v459
    %v465 = vsel %vm460, %v453, %v445
    %v466 = vsel %vm460, %v455, %v447
    %v467 = vsel %vm460, %v457, %v449
    %v468 = vsel %vm460, %v459, %v451
    %s469 = scalar_lea.vmem [#allocation2], 384
    %v470 = vld [vmem:[%s469] sm:$0xff]
    %v471 = vld [vmem:[%s469 + $0x8] sm:$0xff]
    %v472 = vld [vmem:[%s469 + $0x10] sm:$0xff]
    %v473 = vld [vmem:[%s469 + $0x18] sm:$0xff]
    %v474 = vld [vmem:[%s469 + $0x20] sm:$0xff]
    %v475 = vld [vmem:[%s469 + $0x28] sm:$0xff]
    %v476 = vld [vmem:[%s469 + $0x30] sm:$0xff]
    %v477 = vld [vmem:[%s469 + $0x38] sm:$0xff]
    %v478 = vmul.f32 %v461, %v470
    %v479 = vmul.f32 %v465, %v471
    %v480 = vmul.f32 %v462, %v472
    %v481 = vmul.f32 %v466, %v473
    %v482 = vmul.f32 %v463, %v474
    %v483 = vmul.f32 %v467, %v475
    %v484 = vmul.f32 %v464, %v476
    %v485 = vmul.f32 %v468, %v477
    %v486 = vadd.f32 %v436, %v478
    %v487 = vadd.f32 %v437, %v479
    %v488 = vadd.f32 %v438, %v480
    %v489 = vadd.f32 %v439, %v481
    %v490 = vadd.f32 %v440, %v482
    %v491 = vadd.f32 %v441, %v483
    %v492 = vadd.f32 %v442, %v484
    %v493 = vadd.f32 %v443, %v485
    %494 = vrot.lane.b32.xlu0 %v168, 96
    %v495 = vpop.permute.xlu0 %494
    %496 = vrot.lane.b32.xlu0 %v170, 96
    %v497 = vpop.permute.xlu0 %496
    %498 = vrot.lane.b32.xlu0 %v172, 96
    %v499 = vpop.permute.xlu0 %498
    %500 = vrot.lane.b32.xlu0 %v174, 96
    %v501 = vpop.permute.xlu0 %500
    %502 = vrot.lane.b32.xlu0 %v169, 96
    %v503 = vpop.permute.xlu0 %502
    %504 = vrot.lane.b32.xlu0 %v171, 96
    %v505 = vpop.permute.xlu0 %504
    %506 = vrot.lane.b32.xlu0 %v173, 96
    %v507 = vpop.permute.xlu0 %506
    %508 = vrot.lane.b32.xlu0 %v175, 96
    %v509 = vpop.permute.xlu0 %508
    %vm510 = vcmp.lt.s32.totalorder %v210, 96
    %v511 = vsel %vm510, %v495, %v503
    %v512 = vsel %vm510, %v497, %v505
    %v513 = vsel %vm510, %v499, %v507
    %v514 = vsel %vm510, %v501, %v509
    %v515 = vsel %vm510, %v503, %v495
    %v516 = vsel %vm510, %v505, %v497
    %v517 = vsel %vm510, %v507, %v499
    %v518 = vsel %vm510, %v509, %v501
    %s519 = scalar_lea.vmem [#allocation2], 448
    %v520 = vld [vmem:[%s519] sm:$0xff]
    %v521 = vld [vmem:[%s519 + $0x8] sm:$0xff]
    %v522 = vld [vmem:[%s519 + $0x10] sm:$0xff]
    %v523 = vld [vmem:[%s519 + $0x18] sm:$0xff]
    %v524 = vld [vmem:[%s519 + $0x20] sm:$0xff]
    %v525 = vld [vmem:[%s519 + $0x28] sm:$0xff]
    %v526 = vld [vmem:[%s519 + $0x30] sm:$0xff]
    %v527 = vld [vmem:[%s519 + $0x38] sm:$0xff]
    %v528 = vmul.f32 %v511, %v520
    %v529 = vmul.f32 %v515, %v521
    %v530 = vmul.f32 %v512, %v522
    %v531 = vmul.f32 %v516, %v523
    %v532 = vmul.f32 %v513, %v524
    %v533 = vmul.f32 %v517, %v525
    %v534 = vmul.f32 %v514, %v526
    %v535 = vmul.f32 %v518, %v527
    %v536 = vadd.f32 %v486, %v528
    %v537 = vadd.f32 %v487, %v529
    %v538 = vadd.f32 %v488, %v530
    %v539 = vadd.f32 %v489, %v531
    %v540 = vadd.f32 %v490, %v532
    %v541 = vadd.f32 %v491, %v533
    %v542 = vadd.f32 %v492, %v534
    %v543 = vadd.f32 %v493, %v535
    %544 = vrot.lane.b32.xlu0 %v168, 94
    %v545 = vpop.permute.xlu0 %544
    %546 = vrot.lane.b32.xlu0 %v170, 94
    %v547 = vpop.permute.xlu0 %546
    %548 = vrot.lane.b32.xlu0 %v172, 94
    %v549 = vpop.permute.xlu0 %548
    %550 = vrot.lane.b32.xlu0 %v174, 94
    %v551 = vpop.permute.xlu0 %550
    %552 = vrot.lane.b32.xlu0 %v169, 94
    %v553 = vpop.permute.xlu0 %552
    %554 = vrot.lane.b32.xlu0 %v171, 94
    %v555 = vpop.permute.xlu0 %554
    %556 = vrot.lane.b32.xlu0 %v173, 94
    %v557 = vpop.permute.xlu0 %556
    %558 = vrot.lane.b32.xlu0 %v175, 94
    %v559 = vpop.permute.xlu0 %558
    %vm560 = vcmp.lt.s32.totalorder %v210, 94
    %v561 = vsel %vm560, %v545, %v553
    %v562 = vsel %vm560, %v547, %v555
    %v563 = vsel %vm560, %v549, %v557
    %v564 = vsel %vm560, %v551, %v559
    %v565 = vsel %vm560, %v553, %v545
    %v566 = vsel %vm560, %v555, %v547
    %v567 = vsel %vm560, %v557, %v549
    %v568 = vsel %vm560, %v559, %v551
    %s569 = scalar_lea.vmem [#allocation2], 512
    %v570 = vld [vmem:[%s569] sm:$0xff]
    %v571 = vld [vmem:[%s569 + $0x8] sm:$0xff]
    %v572 = vld [vmem:[%s569 + $0x10] sm:$0xff]
    %v573 = vld [vmem:[%s569 + $0x18] sm:$0xff]
    %v574 = vld [vmem:[%s569 + $0x20] sm:$0xff]
    %v575 = vld [vmem:[%s569 + $0x28] sm:$0xff]
    %v576 = vld [vmem:[%s569 + $0x30] sm:$0xff]
    %v577 = vld [vmem:[%s569 + $0x38] sm:$0xff]
    %v578 = vmul.f32 %v561, %v570
    %v579 = vmul.f32 %v565, %v571
    %v580 = vmul.f32 %v562, %v572
    %v581 = vmul.f32 %v566, %v573
    %v582 = vmul.f32 %v563, %v574
    %v583 = vmul.f32 %v567, %v575
    %v584 = vmul.f32 %v564, %v576
    %v585 = vmul.f32 %v568, %v577
    %v586 = vadd.f32 %v536, %v578
    %v587 = vadd.f32 %v537, %v579
    %v588 = vadd.f32 %v538, %v580
    %v589 = vadd.f32 %v539, %v581
    %v590 = vadd.f32 %v540, %v582
    %v591 = vadd.f32 %v541, %v583
    %v592 = vadd.f32 %v542, %v584
    %v593 = vadd.f32 %v543, %v585
    %v594 = vadd.f32 %v586, %v590
    %v595 = vadd.f32 %v587, %v591
    %v596 = vadd.f32 %v588, %v592
    %v597 = vadd.f32 %v589, %v593
    %v598 = vmax.f32 %v594, 0.0
    %v599 = vmax.f32 %v595, 0.0
    %v600 = vmax.f32 %v596, 0.0
    %v601 = vmax.f32 %v597, 0.0
    %v602 = vmin.f32 %v598, 6.0
    %v603 = vmin.f32 %v599, 6.0
    %v604 = vmin.f32 %v600, 6.0
    %v605 = vmin.f32 %v601, 6.0
    %v606 = vld [vmem:[%s3] sm:$0xff]
    %vm607 = vcmask 130048
    %v609 = vsel %vm607, %v606, 0
    %611 = vmatprep.subr.mxu0 0.0
    %612 = vmatpush1.msra.mxu0 0.0
    %613 = vmatprep.subr.mxu0 0.0
    %614 = vmatpush1.msra.mxu0 0.0
    %615 = vmatprep.subr.mxu0 0.0
    %616 = vmatpush1.msra.mxu0 0.0
    %617 = vmatprep.subr.mxu0 0.0
    %618 = vmatpush1.msra.mxu0 0.0
    %619 = vmatprep.subr.mxu0 0.0
    %620 = vmatpush1.msra.mxu0 0.0
    %621 = vmatprep.subr.mxu0 0.0
    %622 = vmatpush1.msra.mxu0 0.0
    %623 = vmatprep.subr.mxu0 0.0
    %624 = vmatpush1.msra.mxu0 0.0
    %625 = vmatprep.subr.mxu0 0.0
    %626 = vmatpush1.msra.mxu0 0.0
    %627 = vmatprep.subr.mxu0 0.0
    %628 = vmatpush1.msra.mxu0 0.0
    %629 = vmatprep.subr.mxu0 0.0
    %630 = vmatpush1.msra.mxu0 0.0
    %631 = vmatprep.subr.mxu0 0.0
    %632 = vmatpush1.msra.mxu0 0.0
    %633 = vmatprep.subr.mxu0 0.0
    %634 = vmatpush1.msra.mxu0 0.0
    %635 = vmatprep.subr.mxu0 0.0
    %636 = vmatpush1.msra.mxu0 0.0
    %637 = vmatprep.subr.mxu0 0.0
    %638 = vmatpush1.msra.mxu0 0.0
    %639 = vmatprep.subr.mxu0 %v605
    %640 = vmatpush1.msra.mxu0 %v604
    %641 = vmatprep.subr.mxu0 %v603
    %642 = vmatpush1.msra.mxu0 %v602
    %643 = vmatprep.subr.mxu0 0.0
    %644 = vmatpush2.msra.mxu0 0.0
    %645 = vmatprep.subr.mxu0 0.0
    %646 = vmatpush2.msra.mxu0 0.0
    %647 = vmatprep.subr.mxu0 0.0
    %648 = vmatpush2.msra.mxu0 0.0
    %649 = vmatprep.subr.mxu0 0.0
    %650 = vmatpush2.msra.mxu0 0.0
    %651 = vmatprep.subr.mxu0 0.0
    %652 = vmatpush2.msra.mxu0 0.0
    %653 = vmatprep.subr.mxu0 0.0
    %654 = vmatpush2.msra.mxu0 0.0
    %655 = vmatprep.subr.mxu0 0.0
    %656 = vmatpush2.msra.mxu0 0.0
    %657 = vmatprep.subr.mxu0 0.0
    %658 = vmatpush2.msra.mxu0 0.0
    %659 = vmatprep.subr.mxu0 0.0
    %660 = vmatpush2.msra.mxu0 0.0
    %661 = vmatprep.subr.mxu0 0.0
    %662 = vmatpush2.msra.mxu0 0.0
    %663 = vmatprep.subr.mxu0 0.0
    %664 = vmatpush2.msra.mxu0 0.0
    %665 = vmatprep.subr.mxu0 0.0
    %666 = vmatpush2.msra.mxu0 0.0
    %667 = vmatprep.subr.mxu0 0.0
    %668 = vmatpush2.msra.mxu0 0.0
    %669 = vmatprep.subr.mxu0 0.0
    %670 = vmatpush2.msra.mxu0 0.0
    %671 = vmatprep.subr.mxu0 0.0
    %672 = vmatpush2.msra.mxu0 0.0
    %673 = vmatprep.subr.mxu0 0.0
    %674 = vmatpush2.msra.mxu0 0.0
    %675 = vmatprep.mubr.f32.mxu0 0.0
    %676 = vmatmul.mubr.f32.gmra.mxu0 %v609
    %v677 = vpop.f32.mrf.mxu0
    %v678 = vadd.f32 0.0, %v677
    %v679 = vpop.f32.mrf.mxu0
    %v680 = vadd.f32 0.0, %v679
    %681 = vdwg.mxu0
    %s682 = scalar_lea.vmem [#allocation5], 64
    %v683 = vld [vmem:[%s682] sm:$0xff]
    %v684 = vld [vmem:[%s682 + $0x8] sm:$0xff]
    %v685 = vmul.f32 %v678, %v683
    %v686 = vmul.f32 %v680, %v684
    %687 = vrot.lane.b32.xlu0 %v678, 34
    %v688 = vpop.permute.xlu0 %687
    %689 = vrot.lane.b32.xlu0 %v680, 34
    %v690 = vpop.permute.xlu0 %689
    %v691 = vsel %vm211, %v688, %v690
    %v692 = vsel %vm211, %v690, %v688
    %v693 = vld [vmem:[#allocation5] sm:$0xff]
    %v694 = vld [vmem:[#allocation5 + $0x8] sm:$0xff]
    %v695 = vmul.f32 %v692, %v693
    %v696 = vmul.f32 %v691, %v694
    %v697 = vadd.f32 %v685, %v695
    %v698 = vadd.f32 %v686, %v696
    %699 = vrot.lane.b32.xlu0 %v678, 32
    %v700 = vpop.permute.xlu0 %699
    %701 = vrot.lane.b32.xlu0 %v680, 32
    %v702 = vpop.permute.xlu0 %701
    %v703 = vsel %vm260, %v700, %v702
    %v704 = vsel %vm260, %v702, %v700
    %s705 = scalar_lea.vmem [#allocation5], 16
    %v706 = vld [vmem:[%s705] sm:$0xff]
    %v707 = vld [vmem:[%s705 + $0x8] sm:$0xff]
    %v708 = vmul.f32 %v704, %v706
    %v709 = vmul.f32 %v703, %v707
    %v710 = vadd.f32 %v697, %v708
    %v711 = vadd.f32 %v698, %v709
    %712 = vrot.lane.b32.xlu0 %v678, 30
    %v713 = vpop.permute.xlu0 %712
    %714 = vrot.lane.b32.xlu0 %v680, 30
    %v715 = vpop.permute.xlu0 %714
    %v716 = vsel %vm310, %v713, %v715
    %v717 = vsel %vm310, %v715, %v713
    %s718 = scalar_lea.vmem [#allocation5], 32
    %v719 = vld [vmem:[%s718] sm:$0xff]
    %v720 = vld [vmem:[%s718 + $0x8] sm:$0xff]
    %v721 = vmul.f32 %v717, %v719
    %v722 = vmul.f32 %v716, %v720
    %v723 = vadd.f32 %v710, %v721
    %v724 = vadd.f32 %v711, %v722
    %725 = vrot.lane.b32.xlu0 %v678, 2
    %v726 = vpop.permute.xlu0 %725
    %727 = vrot.lane.b32.xlu0 %v680, 2
    %v728 = vpop.permute.xlu0 %727
    %v729 = vsel %vm360, %v726, %v728
    %v730 = vsel %vm360, %v728, %v726
    %s731 = scalar_lea.vmem [#allocation5], 48
    %v732 = vld [vmem:[%s731] sm:$0xff]
    %v733 = vld [vmem:[%s731 + $0x8] sm:$0xff]
    %v734 = vmul.f32 %v730, %v732
    %v735 = vmul.f32 %v729, %v733
    %v736 = vadd.f32 %v723, %v734
    %v737 = vadd.f32 %v724, %v735
    %738 = vrot.lane.b32.xlu0 %v678, 126
    %v739 = vpop.permute.xlu0 %738
    %740 = vrot.lane.b32.xlu0 %v680, 126
    %v741 = vpop.permute.xlu0 %740
    %v742 = vsel %vm410, %v739, %v741
    %v743 = vsel %vm410, %v741, %v739
    %s744 = scalar_lea.vmem [#allocation5], 80
    %v745 = vld [vmem:[%s744] sm:$0xff]
    %v746 = vld [vmem:[%s744 + $0x8] sm:$0xff]
    %v747 = vmul.f32 %v742, %v745
    %v748 = vmul.f32 %v743, %v746
    %v749 = vadd.f32 %v736, %v747
    %v750 = vadd.f32 %v737, %v748
    %751 = vrot.lane.b32.xlu0 %v678, 98
    %v752 = vpop.permute.xlu0 %751
    %753 = vrot.lane.b32.xlu0 %v680, 98
    %v754 = vpop.permute.xlu0 %753
    %v755 = vsel %vm460, %v752, %v754
    %v756 = vsel %vm460, %v754, %v752
    %s757 = scalar_lea.vmem [#allocation5], 96
    %v758 = vld [vmem:[%s757] sm:$0xff]
    %v759 = vld [vmem:[%s757 + $0x8] sm:$0xff]
    %v760 = vmul.f32 %v755, %v758
    %v761 = vmul.f32 %v756, %v759
    %v762 = vadd.f32 %v749, %v760
    %v763 = vadd.f32 %v750, %v761
    %764 = vrot.lane.b32.xlu0 %v678, 96
    %v765 = vpop.permute.xlu0 %764
    %766 = vrot.lane.b32.xlu0 %v680, 96
    %v767 = vpop.permute.xlu0 %766
    %v768 = vsel %vm510, %v765, %v767
    %v769 = vsel %vm510, %v767, %v765
    %s770 = scalar_lea.vmem [#allocation5], 112
    %v771 = vld [vmem:[%s770] sm:$0xff]
    %v772 = vld [vmem:[%s770 + $0x8] sm:$0xff]
    %v773 = vmul.f32 %v768, %v771
    %v774 = vmul.f32 %v769, %v772
    %v775 = vadd.f32 %v762, %v773
    %v776 = vadd.f32 %v763, %v774
    %777 = vrot.lane.b32.xlu0 %v678, 94
    %v778 = vpop.permute.xlu0 %777
    %779 = vrot.lane.b32.xlu0 %v680, 94
    %v780 = vpop.permute.xlu0 %779
    %v781 = vsel %vm560, %v778, %v780
    %v782 = vsel %vm560, %v780, %v778
    %s783 = scalar_lea.vmem [#allocation5], 128
    %v784 = vld [vmem:[%s783] sm:$0xff]
    %v785 = vld [vmem:[%s783 + $0x8] sm:$0xff]
    %v786 = vmul.f32 %v781, %v784
    %v787 = vmul.f32 %v782, %v785
    %v788 = vadd.f32 %v775, %v786
    %v789 = vadd.f32 %v776, %v787
    %v790 = vmax.f32 %v788, 0.0
    %v791 = vmax.f32 %v789, 0.0
    %v792 = vmin.f32 %v790, 6.0
    %v793 = vmin.f32 %v791, 6.0
    %v794 = vld [vmem:[%s5] sm:$0xff]
    %v796 = vsel %vm58, %v794, 0
    %798 = vmatprep.subr.mxu0 0.0
    %799 = vmatpush1.msra.mxu0 0.0
    %800 = vmatprep.subr.mxu0 0.0
    %801 = vmatpush1.msra.mxu0 0.0
    %802 = vmatprep.subr.mxu0 0.0
    %803 = vmatpush1.msra.mxu0 0.0
    %804 = vmatprep.subr.mxu0 0.0
    %805 = vmatpush1.msra.mxu0 0.0
    %806 = vmatprep.subr.mxu0 0.0
    %807 = vmatpush1.msra.mxu0 0.0
    %808 = vmatprep.subr.mxu0 0.0
    %809 = vmatpush1.msra.mxu0 0.0
    %810 = vmatprep.subr.mxu0 0.0
    %811 = vmatpush1.msra.mxu0 0.0
    %812 = vmatprep.subr.mxu0 0.0
    %813 = vmatpush1.msra.mxu0 0.0
    %814 = vmatprep.subr.mxu0 0.0
    %815 = vmatpush1.msra.mxu0 0.0
    %816 = vmatprep.subr.mxu0 0.0
    %817 = vmatpush1.msra.mxu0 0.0
    %818 = vmatprep.subr.mxu0 0.0
    %819 = vmatpush1.msra.mxu0 0.0
    %820 = vmatprep.subr.mxu0 0.0
    %821 = vmatpush1.msra.mxu0 0.0
    %822 = vmatprep.subr.mxu0 0.0
    %823 = vmatpush1.msra.mxu0 0.0
    %824 = vmatprep.subr.mxu0 0.0
    %825 = vmatpush1.msra.mxu0 0.0
    %826 = vmatprep.subr.mxu0 0.0
    %827 = vmatpush1.msra.mxu0 0.0
    %828 = vmatprep.subr.mxu0 %v793
    %829 = vmatpush1.msra.mxu0 %v792
    %830 = vmatprep.subr.mxu0 0.0
    %831 = vmatpush2.msra.mxu0 0.0
    %832 = vmatprep.subr.mxu0 0.0
    %833 = vmatpush2.msra.mxu0 0.0
    %834 = vmatprep.subr.mxu0 0.0
    %835 = vmatpush2.msra.mxu0 0.0
    %836 = vmatprep.subr.mxu0 0.0
    %837 = vmatpush2.msra.mxu0 0.0
    %838 = vmatprep.subr.mxu0 0.0
    %839 = vmatpush2.msra.mxu0 0.0
    %840 = vmatprep.subr.mxu0 0.0
    %841 = vmatpush2.msra.mxu0 0.0
    %842 = vmatprep.subr.mxu0 0.0
    %843 = vmatpush2.msra.mxu0 0.0
    %844 = vmatprep.subr.mxu0 0.0
    %845 = vmatpush2.msra.mxu0 0.0
    %846 = vmatprep.subr.mxu0 0.0
    %847 = vmatpush2.msra.mxu0 0.0
    %848 = vmatprep.subr.mxu0 0.0
    %849 = vmatpush2.msra.mxu0 0.0
    %850 = vmatprep.subr.mxu0 0.0
    %851 = vmatpush2.msra.mxu0 0.0
    %852 = vmatprep.subr.mxu0 0.0
    %853 = vmatpush2.msra.mxu0 0.0
    %854 = vmatprep.subr.mxu0 0.0
    %855 = vmatpush2.msra.mxu0 0.0
    %856 = vmatprep.subr.mxu0 0.0
    %857 = vmatpush2.msra.mxu0 0.0
    %858 = vmatprep.subr.mxu0 0.0
    %859 = vmatpush2.msra.mxu0 0.0
    %860 = vmatprep.subr.mxu0 0.0
    %861 = vmatpush2.msra.mxu0 0.0
    %862 = vmatprep.mubr.f32.mxu0 0.0
    %863 = vmatmul.mubr.f32.gmra.mxu0 %v796
    %v864 = vpop.f32.mrf.mxu0
    %v865 = vadd.f32 %v52, %v864
    %v866 = vpop.f32.mrf.mxu0
    %v867 = vadd.f32 %v53, %v866
    %868 = vdwg.mxu0
    %869 = vst [vmem:[#allocation7] sm:$0xff] %v865
    %870 = vst [vmem:[#allocation7 + $0x8] sm:$0xff] %v867
    // Predicated region
    $region34: #{tpu_custom_call.1} parent=1 // pred_check
      _
    $region35: #{tpu_custom_call.1} parent=1 // pred_check_branch
      %872 = sbr.rel (0) target = $region37
    $region36: #{tpu_custom_call.1} parent=1 // pred_region
      %s874 = ssub.s32 256, 256
      %875 = vsyncadd [#allocation4], %s874
      %s877 = sshll.u32 [#allocation7], 4
      %s878 = int_to_ptr.vmem [resolvable:$true] %s877
      %880 = dma.vmem_to_hbm [thread:$0]  %s878, 256, %s6, [#allocation4]
    $region37: #{tpu_custom_call.1} parent=1 // pred_fallthru
      _
    // Predicated region
    $region38: #{tpu_custom_call.1} parent=1 // pred_check
      _
    $region39: #{tpu_custom_call.1} parent=1 // pred_check_branch
      %882 = sbr.rel (0) target = $region41
    $region40: #{tpu_custom_call.1} parent=1 // pred_region
      %883 = dma.done [#allocation4], 256
    $region41: #{tpu_custom_call.1} parent=1 // pred_fallthru
      _
    %884 = vsyncpa [#allocation3], 1
    %885 = vsyncpa [#allocation6], 1
    %886 = vsyncpa [#allocation4], 1

</llo_original>
